<compile_context>
chip_gen: v6e
topology: v6e:2x2x1
jax: 0.10.0
libtpu: 0.0.40
codegen_flags: <defaults>
</compile_context>

<pallas_src>
import jax
import jax.numpy as jnp
from jax.experimental import pallas as pl
from jax.experimental.pallas import tpu as pltpu


def _interp_matrix(src_len: int, dst_len: int):
    """W of shape (src_len, dst_len), float32, such that pos @ W equals
    F.interpolate(pos, size=dst_len, mode='linear', align_corners=False)."""
    i = jnp.arange(dst_len, dtype=jnp.float32)
    scale = src_len / dst_len
    src = (i + 0.5) * scale - 0.5
    src = jnp.maximum(src, 0.0)                        # PyTorch clamps negatives to 0
    i0 = jnp.minimum(jnp.floor(src).astype(jnp.int32), src_len - 1)
    i1 = jnp.minimum(i0 + 1, src_len - 1)
    lam = src - i0.astype(jnp.float32)
    w0 = jax.nn.one_hot(i0, src_len, dtype=jnp.float32) * (1.0 - lam)[:, None]
    w1 = jax.nn.one_hot(i1, src_len, dtype=jnp.float32) * lam[:, None]
    return (w0 + w1).T                                 # (S, N), float32


def _add_pe_kernel(x_ref, pe_ref, o_ref):
    # x_ref: (TB, TL)  lane-dense slab of the input
    # pe_ref: (1, TL)  matching slab of the batch-invariant interpolated PE
    o_ref[...] = x_ref[...] + pe_ref[...]


def _pick_tile(total: int, base: int, cap: int) -> int:
    """Largest multiple of `base` that divides `total`, capped at `cap`.
    Falls back to the full extent when `total` is not a multiple of `base`
    (full-extent blocks are always legal)."""
    if total % base != 0:
        return total
    t = min(cap - cap % base, total)
    while t >= base:
        if total % t == 0:
            return t
        t -= base
    return total


def squeeze_axial_positional_embedding(x, pos_embed):
    """x: (B, C, N).  pos_embed: (1, C, S).  Returns x + interp(pos_embed, size=N)."""
    B, C, N = x.shape
    one, Cp, S = pos_embed.shape
    assert one == 1 and Cp == C, "pos_embed channel dim must match input channel dim"

    # ---- hoisted, batch-invariant interpolation (float32, tiny glue) ------
    w = _interp_matrix(S, N)                                    # (S, N) f32
    interp = jnp.dot(pos_embed[0].astype(jnp.float32), w)       # (C, N) f32
    interp = interp.astype(x.dtype)

    # ---- lane-dense relayout: (B, C, N) -> (B, C*N) ------------------------
    L = C * N
    x2d = x.reshape(B, L)
    pe2d = interp.reshape(1, L)

    tb = _pick_tile(B, 8, 256)        # sublane tile (or full B)
    tl = _pick_tile(L, 128, 2048)     # lane tile (or full C*N)
    grid = (B // tb, L // tl)

    grid_spec = pltpu.PrefetchScalarGridSpec(
        num_scalar_prefetch=0,
        grid=grid,
        in_specs=[
            pl.BlockSpec((tb, tl), lambda b, l: (b, l)),   # x slab
            pl.BlockSpec((1, tl), lambda b, l: (0, l)),    # PE slab (batch-invariant)
        ],
        out_specs=pl.BlockSpec((tb, tl), lambda b, l: (b, l)),
    )

    out2d = pl.pallas_call(
        _add_pe_kernel,
        out_shape=jax.ShapeDtypeStruct((B, L), x.dtype),
        grid_spec=grid_spec,
        input_output_aliases={0: 0},
        compiler_params=pltpu.CompilerParams(
            dimension_semantics=("parallel", "parallel")),
    )(x2d, pe2d)

    return out2d.reshape(B, C, N)


def _reference(x, pos_embed):
    """Pure-JAX reference of the PyTorch forward (for sanity check)."""
    N = x.shape[-1]
    S = pos_embed.shape[-1]
    w = _interp_matrix(S, N)                                    # (S, N) f32
    interp = (pos_embed[0].astype(jnp.float32) @ w).astype(x.dtype)
    return x + interp[None]


if __name__ == "__main__":
    key = jax.random.PRNGKey(0)
    k1, k2 = jax.random.split(key)

    B, C, N = 2, 32, 16      # x: (B, dim, N)
    S = 8                    # pos_embed spatial length ("shape" arg of the module)

    x = jax.random.normal(k1, (B, C, N), dtype=jnp.float32)
    pos_embed = jax.random.normal(k2, (1, C, S), dtype=jnp.float32)  # torch.randn init

    # Reference first (so the kernel's output aliasing can never clobber it).
    ref = jax.block_until_ready(_reference(x, pos_embed))

    out = squeeze_axial_positional_embedding(x, pos_embed)
    out = jax.block_until_ready(out)

    assert out.shape == (B, C, N)
    assert jnp.allclose(out, ref, atol=1e-5, rtol=1e-5)

    print("KERNEL_OK")
</pallas_src>

<mosaic_0001>
module attributes {stable_mosaic.version = 11 : i64} {
  func.func @_add_pe_kernel(%arg0: i32, %arg1: i32, %arg2: memref<2x512xf32, #tpu.memory_space<vmem>>, %arg3: memref<1x512xf32, #tpu.memory_space<vmem>>, %arg4: memref<2x512xf32, #tpu.memory_space<vmem>>) attributes {dimension_semantics = [#tpu.dimension_semantics<parallel>, #tpu.dimension_semantics<parallel>], iteration_bounds = array<i64: 1, 1>, scalar_prefetch = 0 : i64, scratch_operands = 0 : i64, tpu.core_type = #tpu.core_type<tc>, window_params = [{transform_indices = @transform_0, window_bounds = array<i64: 2, 512>}, {transform_indices = @transform_1, window_bounds = array<i64: 1, 512>}, {transform_indices = @transform_2, window_bounds = array<i64: 2, 512>}]} {
    %c0 = arith.constant 0 : index
    %c0_0 = arith.constant 0 : index
    %0 = vector.load %arg2[%c0, %c0_0] : memref<2x512xf32, #tpu.memory_space<vmem>>, vector<2x512xf32>
    %c0_1 = arith.constant 0 : index
    %c0_2 = arith.constant 0 : index
    %1 = vector.load %arg3[%c0_1, %c0_2] : memref<1x512xf32, #tpu.memory_space<vmem>>, vector<1x512xf32>
    %2 = vector.broadcast %1 : vector<1x512xf32> to vector<2x512xf32>
    %3 = arith.addf %0, %2 : vector<2x512xf32>
    %c0_3 = arith.constant 0 : index
    %c0_4 = arith.constant 0 : index
    %4 = vector.load %arg4[%c0_3, %c0_4] : memref<2x512xf32, #tpu.memory_space<vmem>>, vector<2x512xf32>
    tpu.vector_store %arg4[%c0_3, %c0_4], %3 {strides = array<i32>} : memref<2x512xf32, #tpu.memory_space<vmem>>, vector<2x512xf32>,
    return
  }
  func.func @transform_0(%arg0: i32, %arg1: i32) -> (i32, i32) {
    %c0_i32 = arith.constant 0 : i32
    return %arg0, %arg1 : i32, i32
  }
  func.func @transform_1(%arg0: i32, %arg1: i32) -> (i32, i32) {
    %c0_i32 = arith.constant 0 : i32
    %c0_i32_0 = arith.constant 0 : i32
    return %c0_i32, %arg1 : i32, i32
  }
  func.func @transform_2(%arg0: i32, %arg1: i32) -> (i32, i32) {
    %c0_i32 = arith.constant 0 : i32
    return %arg0, %arg1 : i32, i32
  }
}

</mosaic_0001>

<llo_original>
// kernel: tpu_custom_call.1
$region0: #{tpu_custom_call.1}
  #allocation0 [shape = 'u32[]', space=smem, size = 0x4, offset = 0x4, fixed_abs, tag = 'smem constant byte address 0x4 - core index']
  #allocation1 [shape = 'u32[144,128]{1,0:T(1,128)}', space=vmem, size = 0x12000, scoped, tag = 'internal scratch']
  %s0 = inlined_call_operand.hbm [shape: f32[2,512], index: 0, kind: input, shape index: {}, may-alias: {0,2}]
  %s1 = inlined_call_operand.vmem [shape: f32[1,512], index: 1, kind: input, shape index: {}]
  %s2 = inlined_call_operand.hbm [shape: f32[2,512], index: 2, kind: output, shape index: {}, may-alias: {0,2}]
  %s3 = sld [smem:[#allocation0]]
  $region22: #{tpu_custom_call.1} parent=0
    _
  %s5 = ssub.s32 1, %s3
  %s6 = scalar_select 0, %s5, %s3
  $region1: #{tpu_custom_call.1} parent=0
    #allocation2 [shape = 'u8[4096]{0}', space=vmem, size = 0x1000, scoped, tag = 'input window, operand 0, single buffered']
    #allocation3 [shape = 's32[1]{0}', space=sflag, size = 0x4, scoped, tag = 'scoped memory for tpu_custom_call.1']
    #allocation4 [shape = 's32[1]{0}', space=sflag, size = 0x4, scoped, tag = 'scoped memory for tpu_custom_call.1']
    #allocation5 [shape = 'u8[4096]{0}', space=vmem, size = 0x1000, scoped, tag = 'output window, operand 0, single buffered']
    %7 = vsyncpa [#allocation3], 0
    %8 = vsyncpa [#allocation4], 0
    // Predicated region
    $region2: #{tpu_custom_call.1} parent=1 // pred_check
      _
    $region3: #{tpu_custom_call.1} parent=1 // pred_check_branch
      %10 = sbr.rel (0) target = $region5
    $region4: #{tpu_custom_call.1} parent=1 // pred_region
      %s12 = ssub.s32 128, 128
      %13 = vsyncadd [#allocation3], %s12
      %s15 = sshll.u32 [#allocation2], 4
      %s16 = int_to_ptr.vmem [resolvable:$true] %s15
      %18 = dma.hbm_to_vmem [thread:$0]  %s0, 128, %s16, [#allocation3]
    $region5: #{tpu_custom_call.1} parent=1 // pred_fallthru
      _
    // Predicated region
    $region6: #{tpu_custom_call.1} parent=1 // pred_check
      _
    $region7: #{tpu_custom_call.1} parent=1 // pred_check_branch
      %20 = sbr.rel (0) target = $region9
    $region8: #{tpu_custom_call.1} parent=1 // pred_region
      _
    $region9: #{tpu_custom_call.1} parent=1 // pred_fallthru
      _
    // Predicated region
    $region10: #{tpu_custom_call.1} parent=1 // pred_check
      _
    $region11: #{tpu_custom_call.1} parent=1 // pred_check_branch
      %22 = sbr.rel (0) target = $region13
    $region12: #{tpu_custom_call.1} parent=1 // pred_region
      %23 = dma.done [#allocation3], 128
    $region13: #{tpu_custom_call.1} parent=1 // pred_fallthru
      _
    %v24 = vld [vmem:[#allocation2] sm:$0xff]
    %v25 = vld [vmem:[%s1] sm:$0xf]
    %v27 = vlaneseq
    %v28 = vshrl.u32 %v27, 7
    %v29 = vsub.s32 0, %v28
    %v30 = vrot.slane %v25, %v29
    %v31 = vlaneseq
    %v32 = vshrl.u32 %v31, 7
    %v33 = vsub.s32 1, %v32
    %v34 = vrot.slane %v25, %v33
    %v35 = vlaneseq
    %v36 = vshrl.u32 %v35, 7
    %v37 = vsub.s32 2, %v36
    %v38 = vrot.slane %v25, %v37
    %v39 = vlaneseq
    %v40 = vshrl.u32 %v39, 7
    %v41 = vsub.s32 3, %v40
    %v42 = vrot.slane %v25, %v41
    %v43 = vcombine.low %v30, %v34
    %v44 = vcombine.low %v38, %v42
    %v46 = vunpack.c.l.s4 1983009808
    %v47 = vunpack.c.0.s8 %v46
    %v48 = vlaneseq
    %v49 = vshrl.u32 %v48, 7
    %v50 = vsub.s32 %v47, %v49
    %v51 = vrot.slane %v43, %v50
    %v53 = vunpack.c.l.s4 1983009808
    %v54 = vunpack.c.0.s8 %v53
    %v55 = vlaneseq
    %v56 = vshrl.u32 %v55, 7
    %v57 = vsub.s32 %v54, %v56
    %v58 = vrot.slane %v44, %v57
    %v59 = vcombine.low %v51, %v58
    %v61 = vadd.f32 %v24, %v59
    %62 = vst [vmem:[#allocation5] sm:$0xff] %v61
    // Predicated region
    $region14: #{tpu_custom_call.1} parent=1 // pred_check
      _
    $region15: #{tpu_custom_call.1} parent=1 // pred_check_branch
      %64 = sbr.rel (0) target = $region17
    $region16: #{tpu_custom_call.1} parent=1 // pred_region
      %s66 = ssub.s32 128, 128
      %67 = vsyncadd [#allocation4], %s66
      %s69 = sshll.u32 [#allocation5], 4
      %s70 = int_to_ptr.vmem [resolvable:$true] %s69
      %72 = dma.vmem_to_hbm [thread:$0]  %s70, 128, %s2, [#allocation4]
    $region17: #{tpu_custom_call.1} parent=1 // pred_fallthru
      _
    // Predicated region
    $region18: #{tpu_custom_call.1} parent=1 // pred_check
      _
    $region19: #{tpu_custom_call.1} parent=1 // pred_check_branch
      %74 = sbr.rel (0) target = $region21
    $region20: #{tpu_custom_call.1} parent=1 // pred_region
      %75 = dma.done [#allocation4], 128
    $region21: #{tpu_custom_call.1} parent=1 // pred_fallthru
      _
    %76 = vsyncpa [#allocation3], 1
    %77 = vsyncpa [#allocation4], 1

</llo_original>
